<compile_context>
chip_gen: v7x
topology: tpu7x:2x2x1
jax: 0.10.0
libtpu: 0.0.40
codegen_flags: <defaults>
</compile_context>

<pallas_src>
import functools
import math

import jax
import jax.numpy as jnp
from jax.experimental import pallas as pl
from jax.experimental.pallas import tpu as pltpu

_LANE = 128
_SUBLANE_PACK = 32          # multiple-of for row blocks: covers f32(8)/bf16(16)/8-bit(32) tiling


# ------------------------------- kernel --------------------------------------

def _bias_reduce_loss_kernel(w_ref, x_ref, y_ref, o_ref, *,
                             inv_b, inv_n, rows_total, block_rows, needs_mask):
    """Accumulates weight * mean((mean_0(x) - y)^2) into a resident SMEM scalar.

    x_ref: (B, R, 128) VMEM tile    y_ref: (R, 128) VMEM tile
    w_ref: (1,) f32 SMEM            o_ref: (1, 1) f32 SMEM (resident accumulator)
    """
    j = pl.program_id(0)

    @pl.when(j == 0)
    def _init():
        o_ref[0, 0] = 0.0

    x = x_ref[...].astype(jnp.float32)          # (B, R, 128)
    y = y_ref[...].astype(jnp.float32)          # (R, 128)

    avg = jnp.sum(x, axis=0) * inv_b            # batch mean, fully packed tiles
    diff = avg - y
    sq = diff * diff
    if needs_mask:                              # partial last block: drop stale rows
        row_ids = j * block_rows + jax.lax.broadcasted_iota(jnp.int32, sq.shape, 0)
        sq = jnp.where(row_ids < rows_total, sq, 0.0)
    o_ref[0, 0] += jnp.sum(sq)

    @pl.when(j == pl.num_programs(0) - 1)
    def _finalize():
        o_ref[0, 0] = w_ref[0] * (o_ref[0, 0] * inv_n)


# ------------------------------- wrapper --------------------------------------

def bias_reduce_loss(x, y, weight=1.0, *, target_x_tile_bytes=2 * 1024 * 1024):
    """Pallas equivalent of BiasReduceLoss.forward.  Returns a shape-(1,) f32 array
    (matching `w * criterion(...)` with w a 1-element tensor in the PyTorch code)."""
    if not jnp.issubdtype(x.dtype, jnp.floating):
        x = x.astype(jnp.float32)
    if not jnp.issubdtype(y.dtype, jnp.floating):
        y = y.astype(jnp.float32)

    b = x.shape[0]
    n_total = math.prod(x.shape[1:])            # elements of avg (== elements of y)
    assert y.size == n_total, "y must match x's per-sample shape (batch dim of 1)"

    xf = x.reshape(b, n_total)
    yf = y.reshape(1, n_total)

    # Lane-align the element axis only if required (zero padding adds 0 to the SSE;
    # the divisor stays n_total).
    n_pad = ((n_total + _LANE - 1) // _LANE) * _LANE
    if n_pad != n_total:
        xf = jnp.pad(xf, ((0, 0), (0, n_pad - n_total)))
        yf = jnp.pad(yf, ((0, 0), (0, n_pad - n_total)))

    rows = n_pad // _LANE
    xr = xf.reshape(b, rows, _LANE)             # fully packed (sublane, lane) tiles
    yr = yf.reshape(rows, _LANE)

    # Rows per grid step: ~2 MiB of x per block to amortize per-step overhead.
    itemsize = jnp.dtype(x.dtype).itemsize
    r_blk = target_x_tile_bytes // max(1, b * _LANE * itemsize)
    r_blk = max(_SUBLANE_PACK, (r_blk // _SUBLANE_PACK) * _SUBLANE_PACK)
    if rows <= r_blk:
        r_blk = rows                            # single block == full extent
    grid = pl.cdiv(rows, r_blk)
    needs_mask = (rows % r_blk) != 0            # partial last block -> in-kernel mask

    w = jnp.asarray(weight, jnp.float32).reshape(1)

    out = pl.pallas_call(
        functools.partial(
            _bias_reduce_loss_kernel,
            inv_b=1.0 / float(b),
            inv_n=1.0 / float(n_total),
            rows_total=rows,
            block_rows=r_blk,
            needs_mask=needs_mask,
        ),
        out_shape=jax.ShapeDtypeStruct((1, 1), jnp.float32),
        grid=(grid,),
        in_specs=[
            pl.BlockSpec(memory_space=pltpu.MemorySpace.SMEM),       # weight scalar
            pl.BlockSpec((b, r_blk, _LANE), lambda j: (0, j, 0)),    # x row-block
            pl.BlockSpec((r_blk, _LANE), lambda j: (j, 0)),          # y row-block
        ],
        out_specs=pl.BlockSpec(memory_space=pltpu.MemorySpace.SMEM),
        compiler_params=pltpu.CompilerParams(
            dimension_semantics=("arbitrary",),                      # sequential reduction
            vmem_limit_bytes=32 * 1024 * 1024,
        ),
    )(w, xr, yr)

    return out.reshape(1)


# --------------------------------- main ----------------------------------------

if __name__ == "__main__":
    key = jax.random.PRNGKey(0)
    kx, ky = jax.random.split(key)

    # small shapes: batch=2, channels=4, spatial=16x16
    x = jax.random.normal(kx, (2, 4, 16, 16), jnp.float32)
    y = jax.random.normal(ky, (1, 4, 16, 16), jnp.float32)

    loss = bias_reduce_loss(x, y, weight=1.0)
    jax.block_until_ready(loss)

    # pure-JAX reference (same semantics as the PyTorch module)
    ref = 1.0 * jnp.mean((jnp.mean(x, axis=0, keepdims=True) - y) ** 2)

    assert loss.shape == (1,)
    assert jnp.allclose(loss[0], ref, rtol=1e-5, atol=1e-6), (loss, ref)
    print("KERNEL_OK")
</pallas_src>

<mosaic_0001>
module attributes {stable_mosaic.version = 11 : i64} {
  func.func @_bias_reduce_loss_kernel(%arg0: i32, %arg1: memref<1xf32, #tpu.memory_space<smem>>, %arg2: memref<2x8x128xf32, #tpu.memory_space<vmem>>, %arg3: memref<8x128xf32, #tpu.memory_space<vmem>>, %arg4: memref<1x1xf32, #tpu.memory_space<smem>>) attributes {dimension_semantics = [#tpu.dimension_semantics<arbitrary>], iteration_bounds = array<i64: 1>, scalar_prefetch = 0 : i64, scratch_operands = 0 : i64, tpu.core_type = #tpu.core_type<tc>, window_params = [{transform_indices = @transform_0, window_bounds = array<i64: 1>}, {transform_indices = @transform_1, window_bounds = array<i64: 2, 8, 128>}, {transform_indices = @transform_2, window_bounds = array<i64: 8, 128>}, {transform_indices = @transform_3, window_bounds = array<i64: 1, 1>}]} {
    %c0_i32 = arith.constant 0 : i32
    %0 = arith.cmpi eq, %arg0, %c0_i32 : i32
    %1 = arith.extui %0 : i1 to i32
    %c0_i32_0 = arith.constant 0 : i32
    %2 = arith.cmpi ne, %1, %c0_i32_0 : i32
    scf.if %2 {
      %cst_13 = arith.constant 0.000000e+00 : f32
      %c0_14 = arith.constant 0 : index
      %c0_15 = arith.constant 0 : index
      %20 = memref.load %arg4[%c0_14, %c0_15] : memref<1x1xf32, #tpu.memory_space<smem>>
      memref.store %cst_13, %arg4[%c0_14, %c0_15] : memref<1x1xf32, #tpu.memory_space<smem>>
    } else {
    }
    %c0 = arith.constant 0 : index
    %c0_1 = arith.constant 0 : index
    %c0_2 = arith.constant 0 : index
    %3 = vector.load %arg2[%c0, %c0_1, %c0_2] : memref<2x8x128xf32, #tpu.memory_space<vmem>>, vector<2x8x128xf32>
    %c0_3 = arith.constant 0 : index
    %c0_4 = arith.constant 0 : index
    %4 = vector.load %arg3[%c0_3, %c0_4] : memref<8x128xf32, #tpu.memory_space<vmem>>, vector<8x128xf32>
    %cst = arith.constant dense<0.000000e+00> : vector<8x128xf32>
    %5 = vector.multi_reduction <add>, %3, %cst [0] : vector<2x8x128xf32> to vector<8x128xf32>
    %cst_5 = arith.constant 5.000000e-01 : f32
    %6 = vector.broadcast %cst_5 : f32 to vector<8x128xf32>
    %7 = arith.mulf %5, %6 : vector<8x128xf32>
    %8 = arith.subf %7, %4 : vector<8x128xf32>
    %9 = arith.mulf %8, %8 : vector<8x128xf32>
    %c0_6 = arith.constant 0 : index
    %c0_7 = arith.constant 0 : index
    %10 = memref.load %arg4[%c0_6, %c0_7] : memref<1x1xf32, #tpu.memory_space<smem>>
    %11 = vector.shape_cast %9 : vector<8x128xf32> to vector<1x8x128xf32>
    %cst_8 = arith.constant dense<0.000000e+00> : vector<1xf32>
    %12 = vector.multi_reduction <add>, %11, %cst_8 [1, 2] : vector<1x8x128xf32> to vector<1xf32>
    %13 = vector.shape_cast %12 : vector<1xf32> to vector<1x1x1xf32>
    %14 = vector.extract %13[0, 0, 0] : f32 from vector<1x1x1xf32>
    %15 = arith.addf %10, %14 : f32
    %c0_9 = arith.constant 0 : index
    %c0_10 = arith.constant 0 : index
    %16 = memref.load %arg4[%c0_9, %c0_10] : memref<1x1xf32, #tpu.memory_space<smem>>
    memref.store %15, %arg4[%c0_9, %c0_10] : memref<1x1xf32, #tpu.memory_space<smem>>
    %c0_i32_11 = arith.constant 0 : i32
    %17 = arith.cmpi eq, %arg0, %c0_i32_11 : i32
    %18 = arith.extui %17 : i1 to i32
    %c0_i32_12 = arith.constant 0 : i32
    %19 = arith.cmpi ne, %18, %c0_i32_12 : i32
    scf.if %19 {
      %c0_13 = arith.constant 0 : index
      %20 = memref.load %arg1[%c0_13] : memref<1xf32, #tpu.memory_space<smem>>
      %c0_14 = arith.constant 0 : index
      %c0_15 = arith.constant 0 : index
      %21 = memref.load %arg4[%c0_14, %c0_15] : memref<1x1xf32, #tpu.memory_space<smem>>
      %cst_16 = arith.constant 9.765625E-4 : f32
      %22 = arith.mulf %21, %cst_16 : f32
      %23 = arith.mulf %20, %22 : f32
      %c0_17 = arith.constant 0 : index
      %c0_18 = arith.constant 0 : index
      %24 = memref.load %arg4[%c0_17, %c0_18] : memref<1x1xf32, #tpu.memory_space<smem>>
      memref.store %23, %arg4[%c0_17, %c0_18] : memref<1x1xf32, #tpu.memory_space<smem>>
    } else {
    }
    return
  }
  func.func @transform_0(%arg0: i32) -> i32 {
    %c0_i32 = arith.constant 0 : i32
    %c0_i32_0 = arith.constant 0 : i32
    return %c0_i32 : i32
  }
  func.func @transform_1(%arg0: i32) -> (i32, i32, i32) {
    %c0_i32 = arith.constant 0 : i32
    %c0_i32_0 = arith.constant 0 : i32
    %c0_i32_1 = arith.constant 0 : i32
    return %c0_i32, %arg0, %c0_i32_0 : i32, i32, i32
  }
  func.func @transform_2(%arg0: i32) -> (i32, i32) {
    %c0_i32 = arith.constant 0 : i32
    %c0_i32_0 = arith.constant 0 : i32
    return %arg0, %c0_i32 : i32, i32
  }
  func.func @transform_3(%arg0: i32) -> (i32, i32) {
    %c0_i32 = arith.constant 0 : i32
    %c0_i32_0 = arith.constant 0 : i32
    %c0_i32_1 = arith.constant 0 : i32
    return %c0_i32, %c0_i32_0 : i32, i32
  }
}

</mosaic_0001>

<llo_original>
// kernel: tpu_custom_call.1
$region0: #{tpu_custom_call.1}
  #allocation0 [shape = 'u32[]', space=smem, size = 0x4, offset = 0x4, fixed_abs, tag = 'smem constant byte address 0x4 - core index']
  #allocation1 [shape = 'u32[144,128]{1,0:T(1,128)}', space=vmem, size = 0x12000, scoped, tag = 'internal scratch']
  #allocation2 [shape = 'f32[1]{0:T(128)S(6)}', space=smem, size = 0x200, scoped, tag = 'scoped memory for tpu_custom_call.1']
  %s0 = inlined_call_operand.<no memory space> [shape: f32[1], index: 0, kind: input, shape index: {}]
  %s1 = inlined_call_operand.hbm [shape: f32[2,8,128], index: 1, kind: input, shape index: {}]
  %s2 = inlined_call_operand.hbm [shape: f32[8,128], index: 2, kind: input, shape index: {}]
  %s3 = inlined_call_operand.hbm [shape: f32[1,1], index: 3, kind: output, shape index: {}]
  %s4 = sld [smem:[#allocation0]]
  $region38: #{tpu_custom_call.1} parent=0
    _
  %s6 = ssub.s32 1, %s4
  %s7 = scalar_select 0, %s6, %s4
  %8 = sst [smem:[#allocation2]] %s0
  $region1: #{tpu_custom_call.1} parent=0
    #allocation3 [shape = 'u8[8192]{0}', space=vmem, size = 0x2000, scoped, tag = 'input window, operand 1, single buffered']
    #allocation4 [shape = 's32[1]{0}', space=sflag, size = 0x4, scoped, tag = 'scoped memory for tpu_custom_call.1']
    #allocation5 [shape = 's32[1]{0}', space=sflag, size = 0x4, scoped, tag = 'scoped memory for tpu_custom_call.1']
    #allocation6 [shape = 'u8[4096]{0}', space=vmem, size = 0x1000, scoped, tag = 'input window, operand 2, single buffered']
    #allocation7 [shape = 's32[1]{0}', space=sflag, size = 0x4, scoped, tag = 'scoped memory for tpu_custom_call.1']
    #allocation8 [shape = 'u8[512]{0}', space=smem, size = 0x200, scoped, tag = 'output window, operand 0, single buffered']
    %9 = vsyncpa [#allocation4], 0
    %10 = vsyncpa [#allocation7], 0
    %11 = vsyncpa [#allocation5], 0
    // Predicated region
    $region2: #{tpu_custom_call.1} parent=1 // pred_check
      _
    $region3: #{tpu_custom_call.1} parent=1 // pred_check_branch
      %13 = sbr.rel (0) target = $region5
    $region4: #{tpu_custom_call.1} parent=1 // pred_region
      _
    $region5: #{tpu_custom_call.1} parent=1 // pred_fallthru
      _
    // Predicated region
    $region6: #{tpu_custom_call.1} parent=1 // pred_check
      _
    $region7: #{tpu_custom_call.1} parent=1 // pred_check_branch
      %15 = sbr.rel (0) target = $region9
    $region8: #{tpu_custom_call.1} parent=1 // pred_region
      %s17 = ssub.s32 256, 256
      %18 = vsyncadd [#allocation4], %s17
      %s19 = sshll.u32 [#allocation3], 4
      %s20 = int_to_ptr.vmem [resolvable:$true] %s19
      %25 = dma.hbm_to_vmem [thread:$0]  %s1, 256, %s20, [#allocation4], 128, 128, 8
    $region9: #{tpu_custom_call.1} parent=1 // pred_fallthru
      _
    // Predicated region
    $region10: #{tpu_custom_call.1} parent=1 // pred_check
      _
    $region11: #{tpu_custom_call.1} parent=1 // pred_check_branch
      %27 = sbr.rel (0) target = $region13
    $region12: #{tpu_custom_call.1} parent=1 // pred_region
      %s29 = ssub.s32 128, 128
      %30 = vsyncadd [#allocation7], %s29
      %s32 = sshll.u32 [#allocation6], 4
      %s33 = int_to_ptr.vmem [resolvable:$true] %s32
      %35 = dma.hbm_to_vmem [thread:$0]  %s2, 128, %s33, [#allocation7]
    $region13: #{tpu_custom_call.1} parent=1 // pred_fallthru
      _
    // Predicated region
    $region14: #{tpu_custom_call.1} parent=1 // pred_check
      _
    $region15: #{tpu_custom_call.1} parent=1 // pred_check_branch
      %37 = sbr.rel (0) target = $region17
    $region16: #{tpu_custom_call.1} parent=1 // pred_region
      %38 = dma.done [#allocation4], 256
    $region17: #{tpu_custom_call.1} parent=1 // pred_fallthru
      _
    // Predicated region
    $region18: #{tpu_custom_call.1} parent=1 // pred_check
      _
    $region19: #{tpu_custom_call.1} parent=1 // pred_check_branch
      %40 = sbr.rel (0) target = $region21
    $region20: #{tpu_custom_call.1} parent=1 // pred_region
      %41 = dma.done [#allocation7], 128
    $region21: #{tpu_custom_call.1} parent=1 // pred_fallthru
      _
    %p42 = scmp.eq.s32.totalorder 0, 0
    // Predicated region
    $region22: #{tpu_custom_call.1} parent=1 // pred_check
      %p43 = pneg %p42
    $region23: #{tpu_custom_call.1} parent=1 // pred_check_branch
      %45 = sbr.rel (%p43) target = $region25
    $region24: #{tpu_custom_call.1} parent=1 // pred_region
      %s46 = scalar_lea.smem [#allocation8], 0
      %47 = sst [smem:[%s46]] 0.0
    $region25: #{tpu_custom_call.1} parent=1 // pred_fallthru
      _
    %v48 = vld [vmem:[#allocation3] sm:$0xff]
    %v49 = vld [vmem:[#allocation3 + $0x8] sm:$0xff]
    %v50 = vld [vmem:[#allocation6] sm:$0xff]
    %v51 = vadd.f32 %v48, %v49
    %v52 = vmul.f32 %v51, 0.5
    %v53 = vsub.f32 %v52, %v50
    %v54 = vmul.f32 %v53, %v53
    %s55 = sld [smem:[#allocation8]]
    %56 = vadd.xlane.f32.xlu0 %v54
    %v57 = vpop.xlane.xlu0 %56
    %v58 = vrot.slane %v57, 4
    %v59 = vadd.f32 %v57, %v58
    %v60 = vrot.slane %v59, 2
    %v61 = vadd.f32 %v59, %v60
    %v62 = vrot.slane %v61, 1
    %v63 = vadd.f32 %v61, %v62
    %s64 = vtos %v63
    %s65 = sadd.f32 %s55, %s64
    %s66 = scalar_lea.smem [#allocation8], 0
    %67 = sst [smem:[%s66]] %s65
    // Predicated region
    $region26: #{tpu_custom_call.1} parent=1 // pred_check
      %p68 = pneg %p42
    $region27: #{tpu_custom_call.1} parent=1 // pred_check_branch
      %70 = sbr.rel (%p68) target = $region29
    $region28: #{tpu_custom_call.1} parent=1 // pred_region
      %s71 = sld [smem:[#allocation2]]
      %s72 = sld [smem:[#allocation8]]
      %s73 = smul.f32 %s72, 0.0009765625
      %s74 = smul.f32 %s71, %s73
      %75 = sst [smem:[%s66]] %s74
    $region29: #{tpu_custom_call.1} parent=1 // pred_fallthru
      _
    // Predicated region
    $region30: #{tpu_custom_call.1} parent=1 // pred_check
      _
    $region31: #{tpu_custom_call.1} parent=1 // pred_check_branch
      %77 = sbr.rel (0) target = $region33
    $region32: #{tpu_custom_call.1} parent=1 // pred_region
      %s79 = ssub.s32 16, 16
      %80 = vsyncadd [#allocation5], %s79
      %83 = dma.smem_to_hbm [#allocation8], 16, %s3, [#allocation5]
    $region33: #{tpu_custom_call.1} parent=1 // pred_fallthru
      _
    // Predicated region
    $region34: #{tpu_custom_call.1} parent=1 // pred_check
      _
    $region35: #{tpu_custom_call.1} parent=1 // pred_check_branch
      %85 = sbr.rel (0) target = $region37
    $region36: #{tpu_custom_call.1} parent=1 // pred_region
      %86 = dma.done [#allocation5], 16
    $region37: #{tpu_custom_call.1} parent=1 // pred_fallthru
      _
    %87 = sfence
    %88 = vsyncpa [#allocation4], 1
    %89 = vsyncpa [#allocation7], 1
    %90 = vsyncpa [#allocation5], 1

</llo_original>
